<compile_context>
chip_gen: v6e
topology: v6e:2x2x1
jax: 0.10.0
libtpu: 0.0.40
codegen_flags: <defaults>
</compile_context>

<pallas_src>
import jax
import jax.numpy as jnp
from jax.experimental import pallas as pl
from jax.experimental.pallas import tpu as pltpu

_IN = 4        # input features
_HID = 3       # hidden units
_LANE = 128    # TPU lane width
_SUB = 8       # sublanes per f32 vreg
_TC_TARGET = 32768  # lanes per tile column axis -> 4 MiB input DMA per grid step


def _sigmoid(z):
    # One EUP op (tanh) instead of exp + reciprocal; exact (no approx recip error).
    return 0.5 * jnp.tanh(0.5 * z) + 0.5


def _discriminator_kernel(w1_ref, b1_ref, w2_ref, b2_ref, x_ref, o_ref):
    """Weights/biases in SMEM (scalars); x_ref: (4*8, TC) VMEM; o_ref: (8, TC) VMEM.

    Layout: batch folded onto (sublane, lane) -> every vector value is a dense
    (8, TC) slab; the output store is an unmasked full-lane, full-sublane `vst`.
    """
    # Feature k occupies sublane rows [8k, 8k+8): a dense (8, TC) slab per feature.
    feats = [x_ref[k * _SUB:(k + 1) * _SUB, :] for k in range(_IN)]

    y = None
    for j in range(_HID):                       # Linear(4, 3), unrolled VPU FMAs
        h = w1_ref[0, j] * feats[0]
        for k in range(1, _IN):
            h = h + w1_ref[k, j] * feats[k]
        h = _sigmoid(h + b1_ref[j])
        contrib = w2_ref[j] * h                 # Linear(3, 1) accumulation
        y = contrib if y is None else y + contrib
    o_ref[...] = _sigmoid(y + b2_ref[0])


def _choose_tiling(B):
    """Pick (pad_b, cb, tc): batch padded, folded column count, tile columns."""
    # Fold batch into (8, cb); pad batch to a multiple of 8*128 first.
    pad_b = pl.cdiv(B, _SUB * _LANE) * (_SUB * _LANE)
    cb = pad_b // _SUB
    tc = min(_TC_TARGET, cb)
    # Keep >= 4 grid steps when the batch allows (pipelining; v7x 2-TC split).
    if cb >= 4 * _LANE and cb // tc < 4:
        tc = max(_LANE, (cb // 4) // _LANE * _LANE)
    # Re-pad so cb is a multiple of the tile width.
    cb = pl.cdiv(cb, tc) * tc
    return cb * _SUB, cb, tc


def discriminator_forward(x, w1, b1, w2, b2):
    """x: (B, 4); w1: (4, 3); b1: (3,)/(1,3); w2: (3, 1); b2: (1,)/(1,1) -> (B, 1)."""
    B = x.shape[0]
    pad_b, cb, tc = _choose_tiling(B)

    # Flatten params for scalar SMEM access.
    w1f = w1.astype(jnp.float32)                  # (4, 3)
    b1f = b1.reshape(-1).astype(jnp.float32)      # (3,)
    w2f = w2.reshape(-1).astype(jnp.float32)      # (3,)
    b2f = b2.reshape(-1).astype(jnp.float32)      # (1,)

    # Batch-on-lanes layout; cast / pad only when actually needed.
    xt = x if x.dtype == jnp.float32 else x.astype(jnp.float32)
    xt = xt.T                                     # (4, B)
    if pad_b != B:
        xt = jnp.pad(xt, ((0, 0), (0, pad_b - B)))
    # Free contiguous reshape: (4, pad_b) -> (4*8, cb); feature k -> rows [8k, 8k+8).
    xf = xt.reshape(_IN * _SUB, cb)

    grid = (cb // tc,)
    smem_spec = pl.BlockSpec(memory_space=pltpu.MemorySpace.SMEM)

    out = pl.pallas_call(
        _discriminator_kernel,
        out_shape=jax.ShapeDtypeStruct((_SUB, cb), jnp.float32),
        grid=grid,
        in_specs=[
            smem_spec,                                          # w1 (4, 3)
            smem_spec,                                          # b1 (3,)
            smem_spec,                                          # w2 (3,)
            smem_spec,                                          # b2 (1,)
            pl.BlockSpec((_IN * _SUB, tc), lambda i: (0, i)),   # x  (32, cb) -> (32, tc)
        ],
        out_specs=pl.BlockSpec((_SUB, tc), lambda i: (0, i)),   # (8, tc) dense slab
        compiler_params=pltpu.CompilerParams(
            dimension_semantics=("parallel",),
            vmem_limit_bytes=32 * 1024 * 1024,
        ),
    )(w1f, b1f, w2f, b2f, xf)

    # (8, cb) row-major flatten restores plain batch order: index = r*cb + col.
    return out.reshape(-1)[:B].reshape(B, 1)


def _init_linear(key, fan_in, fan_out):
    # Deterministic init mimicking nn.Linear default: U(-1/sqrt(fan_in), 1/sqrt(fan_in)).
    kw, kb = jax.random.split(key)
    bound = 1.0 / (fan_in ** 0.5)
    # Stored already transposed: (fan_in, fan_out) so the math is x @ W + b.
    w = jax.random.uniform(kw, (fan_in, fan_out), jnp.float32, -bound, bound)
    b = jax.random.uniform(kb, (fan_out,), jnp.float32, -bound, bound)
    return w, b


def reference_forward(x, w1, b1, w2, b2):
    h = jax.nn.sigmoid(x @ w1 + b1[None, :])
    return jax.nn.sigmoid(h @ w2 + b2[None, :])


if __name__ == "__main__":
    key = jax.random.PRNGKey(0)
    k_x, k_x2, k_l1, k_l2 = jax.random.split(key, 4)

    w1, b1 = _init_linear(k_l1, _IN, _HID)
    w2, b2 = _init_linear(k_l2, _HID, 1)

    # Small batch (single tile, padded).
    batch = 8
    x = jax.random.normal(k_x, (batch, _IN), jnp.float32)
    out = jax.block_until_ready(discriminator_forward(x, w1, b1, w2, b2))
    ref = reference_forward(x, w1, b1, w2, b2)
    assert out.shape == (batch, 1), out.shape
    assert jnp.allclose(out, ref, atol=2e-5, rtol=2e-5), "mismatch vs reference (small)"

    # Ragged batch exercising padding + a multi-step grid.
    batch2 = 4500
    x2 = jax.random.normal(k_x2, (batch2, _IN), jnp.float32)
    out2 = jax.block_until_ready(discriminator_forward(x2, w1, b1, w2, b2))
    ref2 = reference_forward(x2, w1, b1, w2, b2)
    assert out2.shape == (batch2, 1), out2.shape
    assert jnp.allclose(out2, ref2, atol=2e-5, rtol=2e-5), "mismatch vs reference (ragged)"

    print("KERNEL_OK")
</pallas_src>

<mosaic_0001>
module attributes {stable_mosaic.version = 11 : i64} {
  func.func @_discriminator_kernel(%arg0: i32, %arg1: memref<4x3xf32, #tpu.memory_space<smem>>, %arg2: memref<3xf32, #tpu.memory_space<smem>>, %arg3: memref<3xf32, #tpu.memory_space<smem>>, %arg4: memref<1xf32, #tpu.memory_space<smem>>, %arg5: memref<32x128xf32, #tpu.memory_space<vmem>>, %arg6: memref<8x128xf32, #tpu.memory_space<vmem>>) attributes {dimension_semantics = [#tpu.dimension_semantics<parallel>], iteration_bounds = array<i64: 1>, scalar_prefetch = 0 : i64, scratch_operands = 0 : i64, tpu.core_type = #tpu.core_type<tc>, window_params = [{transform_indices = @transform_0, window_bounds = array<i64: 4, 3>}, {transform_indices = @transform_1, window_bounds = array<i64: 3>}, {transform_indices = @transform_2, window_bounds = array<i64: 3>}, {transform_indices = @transform_3, window_bounds = array<i64: 1>}, {transform_indices = @transform_4, window_bounds = array<i64: 32, 128>}, {transform_indices = @transform_5, window_bounds = array<i64: 8, 128>}]} {
    %c0 = arith.constant 0 : index
    %c0_0 = arith.constant 0 : index
    %0 = vector.load %arg5[%c0, %c0_0] : memref<32x128xf32, #tpu.memory_space<vmem>>, vector<8x128xf32>
    %c8 = arith.constant 8 : index
    %c0_1 = arith.constant 0 : index
    %1 = vector.load %arg5[%c8, %c0_1] : memref<32x128xf32, #tpu.memory_space<vmem>>, vector<8x128xf32>
    %c16 = arith.constant 16 : index
    %c0_2 = arith.constant 0 : index
    %2 = vector.load %arg5[%c16, %c0_2] : memref<32x128xf32, #tpu.memory_space<vmem>>, vector<8x128xf32>
    %c24 = arith.constant 24 : index
    %c0_3 = arith.constant 0 : index
    %3 = vector.load %arg5[%c24, %c0_3] : memref<32x128xf32, #tpu.memory_space<vmem>>, vector<8x128xf32>
    %c0_4 = arith.constant 0 : index
    %c0_5 = arith.constant 0 : index
    %4 = memref.load %arg1[%c0_4, %c0_5] : memref<4x3xf32, #tpu.memory_space<smem>>
    %5 = vector.broadcast %4 : f32 to vector<8x128xf32>
    %6 = arith.mulf %5, %0 : vector<8x128xf32>
    %c1 = arith.constant 1 : index
    %c0_6 = arith.constant 0 : index
    %7 = memref.load %arg1[%c1, %c0_6] : memref<4x3xf32, #tpu.memory_space<smem>>
    %8 = vector.broadcast %7 : f32 to vector<8x128xf32>
    %9 = arith.mulf %8, %1 : vector<8x128xf32>
    %10 = arith.addf %6, %9 : vector<8x128xf32>
    %c2 = arith.constant 2 : index
    %c0_7 = arith.constant 0 : index
    %11 = memref.load %arg1[%c2, %c0_7] : memref<4x3xf32, #tpu.memory_space<smem>>
    %12 = vector.broadcast %11 : f32 to vector<8x128xf32>
    %13 = arith.mulf %12, %2 : vector<8x128xf32>
    %14 = arith.addf %10, %13 : vector<8x128xf32>
    %c3 = arith.constant 3 : index
    %c0_8 = arith.constant 0 : index
    %15 = memref.load %arg1[%c3, %c0_8] : memref<4x3xf32, #tpu.memory_space<smem>>
    %16 = vector.broadcast %15 : f32 to vector<8x128xf32>
    %17 = arith.mulf %16, %3 : vector<8x128xf32>
    %18 = arith.addf %14, %17 : vector<8x128xf32>
    %c0_9 = arith.constant 0 : index
    %19 = memref.load %arg2[%c0_9] : memref<3xf32, #tpu.memory_space<smem>>
    %20 = vector.broadcast %19 : f32 to vector<8x128xf32>
    %21 = arith.addf %18, %20 : vector<8x128xf32>
    %cst = arith.constant 5.000000e-01 : f32
    %22 = vector.broadcast %cst : f32 to vector<8x128xf32>
    %23 = arith.mulf %22, %21 : vector<8x128xf32>
    %24 = math.tanh %23 : vector<8x128xf32>
    %cst_10 = arith.constant 5.000000e-01 : f32
    %25 = vector.broadcast %cst_10 : f32 to vector<8x128xf32>
    %26 = arith.mulf %25, %24 : vector<8x128xf32>
    %cst_11 = arith.constant 5.000000e-01 : f32
    %27 = vector.broadcast %cst_11 : f32 to vector<8x128xf32>
    %28 = arith.addf %26, %27 : vector<8x128xf32>
    %c0_12 = arith.constant 0 : index
    %29 = memref.load %arg3[%c0_12] : memref<3xf32, #tpu.memory_space<smem>>
    %30 = vector.broadcast %29 : f32 to vector<8x128xf32>
    %31 = arith.mulf %30, %28 : vector<8x128xf32>
    %c0_13 = arith.constant 0 : index
    %c1_14 = arith.constant 1 : index
    %32 = memref.load %arg1[%c0_13, %c1_14] : memref<4x3xf32, #tpu.memory_space<smem>>
    %33 = vector.broadcast %32 : f32 to vector<8x128xf32>
    %34 = arith.mulf %33, %0 : vector<8x128xf32>
    %c1_15 = arith.constant 1 : index
    %c1_16 = arith.constant 1 : index
    %35 = memref.load %arg1[%c1_15, %c1_16] : memref<4x3xf32, #tpu.memory_space<smem>>
    %36 = vector.broadcast %35 : f32 to vector<8x128xf32>
    %37 = arith.mulf %36, %1 : vector<8x128xf32>
    %38 = arith.addf %34, %37 : vector<8x128xf32>
    %c2_17 = arith.constant 2 : index
    %c1_18 = arith.constant 1 : index
    %39 = memref.load %arg1[%c2_17, %c1_18] : memref<4x3xf32, #tpu.memory_space<smem>>
    %40 = vector.broadcast %39 : f32 to vector<8x128xf32>
    %41 = arith.mulf %40, %2 : vector<8x128xf32>
    %42 = arith.addf %38, %41 : vector<8x128xf32>
    %c3_19 = arith.constant 3 : index
    %c1_20 = arith.constant 1 : index
    %43 = memref.load %arg1[%c3_19, %c1_20] : memref<4x3xf32, #tpu.memory_space<smem>>
    %44 = vector.broadcast %43 : f32 to vector<8x128xf32>
    %45 = arith.mulf %44, %3 : vector<8x128xf32>
    %46 = arith.addf %42, %45 : vector<8x128xf32>
    %c1_21 = arith.constant 1 : index
    %47 = memref.load %arg2[%c1_21] : memref<3xf32, #tpu.memory_space<smem>>
    %48 = vector.broadcast %47 : f32 to vector<8x128xf32>
    %49 = arith.addf %46, %48 : vector<8x128xf32>
    %cst_22 = arith.constant 5.000000e-01 : f32
    %50 = vector.broadcast %cst_22 : f32 to vector<8x128xf32>
    %51 = arith.mulf %50, %49 : vector<8x128xf32>
    %52 = math.tanh %51 : vector<8x128xf32>
    %cst_23 = arith.constant 5.000000e-01 : f32
    %53 = vector.broadcast %cst_23 : f32 to vector<8x128xf32>
    %54 = arith.mulf %53, %52 : vector<8x128xf32>
    %cst_24 = arith.constant 5.000000e-01 : f32
    %55 = vector.broadcast %cst_24 : f32 to vector<8x128xf32>
    %56 = arith.addf %54, %55 : vector<8x128xf32>
    %c1_25 = arith.constant 1 : index
    %57 = memref.load %arg3[%c1_25] : memref<3xf32, #tpu.memory_space<smem>>
    %58 = vector.broadcast %57 : f32 to vector<8x128xf32>
    %59 = arith.mulf %58, %56 : vector<8x128xf32>
    %60 = arith.addf %31, %59 : vector<8x128xf32>
    %c0_26 = arith.constant 0 : index
    %c2_27 = arith.constant 2 : index
    %61 = memref.load %arg1[%c0_26, %c2_27] : memref<4x3xf32, #tpu.memory_space<smem>>
    %62 = vector.broadcast %61 : f32 to vector<8x128xf32>
    %63 = arith.mulf %62, %0 : vector<8x128xf32>
    %c1_28 = arith.constant 1 : index
    %c2_29 = arith.constant 2 : index
    %64 = memref.load %arg1[%c1_28, %c2_29] : memref<4x3xf32, #tpu.memory_space<smem>>
    %65 = vector.broadcast %64 : f32 to vector<8x128xf32>
    %66 = arith.mulf %65, %1 : vector<8x128xf32>
    %67 = arith.addf %63, %66 : vector<8x128xf32>
    %c2_30 = arith.constant 2 : index
    %c2_31 = arith.constant 2 : index
    %68 = memref.load %arg1[%c2_30, %c2_31] : memref<4x3xf32, #tpu.memory_space<smem>>
    %69 = vector.broadcast %68 : f32 to vector<8x128xf32>
    %70 = arith.mulf %69, %2 : vector<8x128xf32>
    %71 = arith.addf %67, %70 : vector<8x128xf32>
    %c3_32 = arith.constant 3 : index
    %c2_33 = arith.constant 2 : index
    %72 = memref.load %arg1[%c3_32, %c2_33] : memref<4x3xf32, #tpu.memory_space<smem>>
    %73 = vector.broadcast %72 : f32 to vector<8x128xf32>
    %74 = arith.mulf %73, %3 : vector<8x128xf32>
    %75 = arith.addf %71, %74 : vector<8x128xf32>
    %c2_34 = arith.constant 2 : index
    %76 = memref.load %arg2[%c2_34] : memref<3xf32, #tpu.memory_space<smem>>
    %77 = vector.broadcast %76 : f32 to vector<8x128xf32>
    %78 = arith.addf %75, %77 : vector<8x128xf32>
    %cst_35 = arith.constant 5.000000e-01 : f32
    %79 = vector.broadcast %cst_35 : f32 to vector<8x128xf32>
    %80 = arith.mulf %79, %78 : vector<8x128xf32>
    %81 = math.tanh %80 : vector<8x128xf32>
    %cst_36 = arith.constant 5.000000e-01 : f32
    %82 = vector.broadcast %cst_36 : f32 to vector<8x128xf32>
    %83 = arith.mulf %82, %81 : vector<8x128xf32>
    %cst_37 = arith.constant 5.000000e-01 : f32
    %84 = vector.broadcast %cst_37 : f32 to vector<8x128xf32>
    %85 = arith.addf %83, %84 : vector<8x128xf32>
    %c2_38 = arith.constant 2 : index
    %86 = memref.load %arg3[%c2_38] : memref<3xf32, #tpu.memory_space<smem>>
    %87 = vector.broadcast %86 : f32 to vector<8x128xf32>
    %88 = arith.mulf %87, %85 : vector<8x128xf32>
    %89 = arith.addf %60, %88 : vector<8x128xf32>
    %c0_39 = arith.constant 0 : index
    %90 = memref.load %arg4[%c0_39] : memref<1xf32, #tpu.memory_space<smem>>
    %91 = vector.broadcast %90 : f32 to vector<8x128xf32>
    %92 = arith.addf %89, %91 : vector<8x128xf32>
    %cst_40 = arith.constant 5.000000e-01 : f32
    %93 = vector.broadcast %cst_40 : f32 to vector<8x128xf32>
    %94 = arith.mulf %93, %92 : vector<8x128xf32>
    %95 = math.tanh %94 : vector<8x128xf32>
    %cst_41 = arith.constant 5.000000e-01 : f32
    %96 = vector.broadcast %cst_41 : f32 to vector<8x128xf32>
    %97 = arith.mulf %96, %95 : vector<8x128xf32>
    %cst_42 = arith.constant 5.000000e-01 : f32
    %98 = vector.broadcast %cst_42 : f32 to vector<8x128xf32>
    %99 = arith.addf %97, %98 : vector<8x128xf32>
    %c0_43 = arith.constant 0 : index
    %c0_44 = arith.constant 0 : index
    %100 = vector.load %arg6[%c0_43, %c0_44] : memref<8x128xf32, #tpu.memory_space<vmem>>, vector<8x128xf32>
    tpu.vector_store %arg6[%c0_43, %c0_44], %99 {strides = array<i32>} : memref<8x128xf32, #tpu.memory_space<vmem>>, vector<8x128xf32>,
    return
  }
  func.func @transform_0(%arg0: i32) -> (i32, i32) {
    %c0_i32 = arith.constant 0 : i32
    %c0_i32_0 = arith.constant 0 : i32
    %c0_i32_1 = arith.constant 0 : i32
    return %c0_i32, %c0_i32_0 : i32, i32
  }
  func.func @transform_1(%arg0: i32) -> i32 {
    %c0_i32 = arith.constant 0 : i32
    %c0_i32_0 = arith.constant 0 : i32
    return %c0_i32 : i32
  }
  func.func @transform_2(%arg0: i32) -> i32 {
    %c0_i32 = arith.constant 0 : i32
    %c0_i32_0 = arith.constant 0 : i32
    return %c0_i32 : i32
  }
  func.func @transform_3(%arg0: i32) -> i32 {
    %c0_i32 = arith.constant 0 : i32
    %c0_i32_0 = arith.constant 0 : i32
    return %c0_i32 : i32
  }
  func.func @transform_4(%arg0: i32) -> (i32, i32) {
    %c0_i32 = arith.constant 0 : i32
    %c0_i32_0 = arith.constant 0 : i32
    return %c0_i32, %arg0 : i32, i32
  }
  func.func @transform_5(%arg0: i32) -> (i32, i32) {
    %c0_i32 = arith.constant 0 : i32
    %c0_i32_0 = arith.constant 0 : i32
    return %c0_i32, %arg0 : i32, i32
  }
}

</mosaic_0001>

<llo_original>
// kernel: tpu_custom_call.1
$region0: #{tpu_custom_call.1}
  #allocation0 [shape = 'u32[]', space=smem, size = 0x4, offset = 0x4, fixed_abs, tag = 'smem constant byte address 0x4 - core index']
  #allocation1 [shape = 'u32[144,128]{1,0:T(1,128)}', space=vmem, size = 0x12000, scoped, tag = 'internal scratch']
  #allocation2 [shape = 'f32[1]{0:T(128)S(6)}', space=smem, size = 0x200, scoped, tag = 'scoped memory for tpu_custom_call.1']
  %s0 = inlined_call_operand.hbm [shape: f32[4,3], index: 0, kind: input, shape index: {}]
  %s1 = inlined_call_operand.vmem [shape: f32[3], index: 1, kind: input, shape index: {}]
  %s2 = inlined_call_operand.vmem [shape: f32[3], index: 2, kind: input, shape index: {}]
  %s3 = inlined_call_operand.<no memory space> [shape: f32[1], index: 3, kind: input, shape index: {}]
  %s4 = inlined_call_operand.hbm [shape: f32[32,128], index: 4, kind: input, shape index: {}]
  %s5 = inlined_call_operand.hbm [shape: f32[8,128], index: 5, kind: output, shape index: {}]
  %s6 = sld [smem:[#allocation0]]
  $region46: #{tpu_custom_call.1} parent=0
    _
  %s8 = ssub.s32 1, %s6
  %s9 = scalar_select 0, %s8, %s6
  %10 = sst [smem:[#allocation2]] %s3
  $region1: #{tpu_custom_call.1} parent=0
    #allocation3 [shape = 'u8[2048]{0}', space=smem, size = 0x800, scoped, tag = 'input window, operand 0, single buffered']
    #allocation4 [shape = 's32[1]{0}', space=sflag, size = 0x4, scoped, tag = 'scoped memory for tpu_custom_call.1']
    #allocation5 [shape = 's32[1]{0}', space=sflag, size = 0x4, scoped, tag = 'scoped memory for tpu_custom_call.1']
    #allocation6 [shape = 's32[1]{0}', space=sflag, size = 0x4, scoped, tag = 'scoped memory for tpu_custom_call.1']
    #allocation7 [shape = 's32[1]{0}', space=sflag, size = 0x4, scoped, tag = 'scoped memory for tpu_custom_call.1']
    #allocation8 [shape = 'u8[512]{0}', space=smem, size = 0x200, scoped, tag = 'input window, operand 1, single buffered']
    #allocation9 [shape = 'u8[512]{0}', space=smem, size = 0x200, scoped, tag = 'input window, operand 2, single buffered']
    #allocation10 [shape = 's32[1]{0}', space=sflag, size = 0x4, scoped, tag = 'scoped memory for tpu_custom_call.1']
    #allocation11 [shape = 'u8[16384]{0}', space=vmem, size = 0x4000, scoped, tag = 'input window, operand 4, single buffered']
    #allocation12 [shape = 'u8[4096]{0}', space=vmem, size = 0x1000, scoped, tag = 'output window, operand 0, single buffered']
    %11 = vsyncpa [#allocation6], 0
    %12 = vsyncpa [#allocation7], 0
    %13 = vsyncpa [#allocation10], 0
    %14 = vsyncpa [#allocation4], 0
    %15 = vsyncpa [#allocation5], 0
    // Predicated region
    $region2: #{tpu_custom_call.1} parent=1 // pred_check
      _
    $region3: #{tpu_custom_call.1} parent=1 // pred_check_branch
      %17 = sbr.rel (0) target = $region5
    $region4: #{tpu_custom_call.1} parent=1 // pred_region
      %s19 = ssub.s32 64, 64
      %20 = vsyncadd [#allocation6], %s19
      %23 = dma.hbm_to_smem %s0, 64, [#allocation3], [#allocation6]
    $region5: #{tpu_custom_call.1} parent=1 // pred_fallthru
      _
    // Predicated region
    $region6: #{tpu_custom_call.1} parent=1 // pred_check
      _
    $region7: #{tpu_custom_call.1} parent=1 // pred_check_branch
      %25 = sbr.rel (0) target = $region9
    $region8: #{tpu_custom_call.1} parent=1 // pred_region
      %s27 = ssub.s32 16, 16
      %28 = vsyncadd [#allocation7], %s27
      %s30 = sshll.u32 %s1, 4
      %s31 = int_to_ptr.vmem [resolvable:$true] %s30
      %33 = dma.vmem_to_smem %s31, 16, [#allocation8], [#allocation7]
    $region9: #{tpu_custom_call.1} parent=1 // pred_fallthru
      _
    // Predicated region
    $region10: #{tpu_custom_call.1} parent=1 // pred_check
      _
    $region11: #{tpu_custom_call.1} parent=1 // pred_check_branch
      %35 = sbr.rel (0) target = $region13
    $region12: #{tpu_custom_call.1} parent=1 // pred_region
      %s37 = ssub.s32 16, 16
      %38 = vsyncadd [#allocation10], %s37
      %s40 = sshll.u32 %s2, 4
      %s41 = int_to_ptr.vmem [resolvable:$true] %s40
      %43 = dma.vmem_to_smem %s41, 16, [#allocation9], [#allocation10]
    $region13: #{tpu_custom_call.1} parent=1 // pred_fallthru
      _
    // Predicated region
    $region14: #{tpu_custom_call.1} parent=1 // pred_check
      _
    $region15: #{tpu_custom_call.1} parent=1 // pred_check_branch
      %45 = sbr.rel (0) target = $region17
    $region16: #{tpu_custom_call.1} parent=1 // pred_region
      _
    $region17: #{tpu_custom_call.1} parent=1 // pred_fallthru
      _
    // Predicated region
    $region18: #{tpu_custom_call.1} parent=1 // pred_check
      _
    $region19: #{tpu_custom_call.1} parent=1 // pred_check_branch
      %47 = sbr.rel (0) target = $region21
    $region20: #{tpu_custom_call.1} parent=1 // pred_region
      %s49 = ssub.s32 512, 512
      %50 = vsyncadd [#allocation4], %s49
      %s51 = sshll.u32 [#allocation11], 4
      %s52 = int_to_ptr.vmem [resolvable:$true] %s51
      %57 = dma.hbm_to_vmem [thread:$0]  %s4, 512, %s52, [#allocation4], 128, 128, 8
    $region21: #{tpu_custom_call.1} parent=1 // pred_fallthru
      _
    // Predicated region
    $region22: #{tpu_custom_call.1} parent=1 // pred_check
      _
    $region23: #{tpu_custom_call.1} parent=1 // pred_check_branch
      %59 = sbr.rel (0) target = $region25
    $region24: #{tpu_custom_call.1} parent=1 // pred_region
      %60 = dma.done [#allocation6], 64
    $region25: #{tpu_custom_call.1} parent=1 // pred_fallthru
      _
    // Predicated region
    $region26: #{tpu_custom_call.1} parent=1 // pred_check
      _
    $region27: #{tpu_custom_call.1} parent=1 // pred_check_branch
      %62 = sbr.rel (0) target = $region29
    $region28: #{tpu_custom_call.1} parent=1 // pred_region
      %63 = dma.done [#allocation7], 16
    $region29: #{tpu_custom_call.1} parent=1 // pred_fallthru
      _
    // Predicated region
    $region30: #{tpu_custom_call.1} parent=1 // pred_check
      _
    $region31: #{tpu_custom_call.1} parent=1 // pred_check_branch
      %65 = sbr.rel (0) target = $region33
    $region32: #{tpu_custom_call.1} parent=1 // pred_region
      %66 = dma.done [#allocation10], 16
    $region33: #{tpu_custom_call.1} parent=1 // pred_fallthru
      _
    // Predicated region
    $region34: #{tpu_custom_call.1} parent=1 // pred_check
      _
    $region35: #{tpu_custom_call.1} parent=1 // pred_check_branch
      %68 = sbr.rel (0) target = $region37
    $region36: #{tpu_custom_call.1} parent=1 // pred_region
      %69 = dma.done [#allocation4], 512
    $region37: #{tpu_custom_call.1} parent=1 // pred_fallthru
      _
    %70 = sfence
    %v71 = vld [vmem:[#allocation11] sm:$0xff]
    %v72 = vld [vmem:[#allocation11 + $0x8] sm:$0xff]
    %v73 = vld [vmem:[#allocation11 + $0x10] sm:$0xff]
    %v74 = vld [vmem:[#allocation11 + $0x18] sm:$0xff]
    %s75 = sld [smem:[#allocation3]]
    %v76 = vstv %s75
    %v77 = vmul.f32 %v76, %v71
    %s78 = sld [smem:[#allocation3 + $0x80]]
    %v79 = vstv %s78
    %v80 = vmul.f32 %v79, %v72
    %v81 = vadd.f32 %v77, %v80
    %s82 = sld [smem:[#allocation3 + $0x100]]
    %v83 = vstv %s82
    %v84 = vmul.f32 %v83, %v73
    %v85 = vadd.f32 %v81, %v84
    %s86 = sld [smem:[#allocation3 + $0x180]]
    %v87 = vstv %s86
    %v88 = vmul.f32 %v87, %v74
    %v89 = vadd.f32 %v85, %v88
    %s90 = sld [smem:[#allocation8]]
    %v91 = vstv %s90
    %v92 = vadd.f32 %v89, %v91
    %v93 = vmul.f32 %v92, 0.5
    %v94 = vtanh.pop %v93
    %v95 = vmul.f32 %v94, 0.5
    %v96 = vadd.f32 %v95, 0.5
    %s97 = sld [smem:[#allocation9]]
    %v98 = vstv %s97
    %v99 = vmul.f32 %v98, %v96
    %s100 = sld [smem:[#allocation3 + $0x1]]
    %v101 = vstv %s100
    %v102 = vmul.f32 %v101, %v71
    %s103 = sld [smem:[#allocation3 + $0x81]]
    %v104 = vstv %s103
    %v105 = vmul.f32 %v104, %v72
    %v106 = vadd.f32 %v102, %v105
    %s107 = sld [smem:[#allocation3 + $0x101]]
    %v108 = vstv %s107
    %v109 = vmul.f32 %v108, %v73
    %v110 = vadd.f32 %v106, %v109
    %s111 = sld [smem:[#allocation3 + $0x181]]
    %v112 = vstv %s111
    %v113 = vmul.f32 %v112, %v74
    %v114 = vadd.f32 %v110, %v113
    %s115 = sld [smem:[#allocation8 + $0x1]]
    %v116 = vstv %s115
    %v117 = vadd.f32 %v114, %v116
    %v118 = vmul.f32 %v117, 0.5
    %v119 = vtanh.pop %v118
    %v120 = vmul.f32 %v119, 0.5
    %v121 = vadd.f32 %v120, 0.5
    %s122 = sld [smem:[#allocation9 + $0x1]]
    %v123 = vstv %s122
    %v124 = vmul.f32 %v123, %v121
    %v125 = vadd.f32 %v99, %v124
    %s126 = sld [smem:[#allocation3 + $0x2]]
    %v127 = vstv %s126
    %v128 = vmul.f32 %v127, %v71
    %s129 = sld [smem:[#allocation3 + $0x82]]
    %v130 = vstv %s129
    %v131 = vmul.f32 %v130, %v72
    %v132 = vadd.f32 %v128, %v131
    %s133 = sld [smem:[#allocation3 + $0x102]]
    %v134 = vstv %s133
    %v135 = vmul.f32 %v134, %v73
    %v136 = vadd.f32 %v132, %v135
    %s137 = sld [smem:[#allocation3 + $0x182]]
    %v138 = vstv %s137
    %v139 = vmul.f32 %v138, %v74
    %v140 = vadd.f32 %v136, %v139
    %s141 = sld [smem:[#allocation8 + $0x2]]
    %v142 = vstv %s141
    %v143 = vadd.f32 %v140, %v142
    %v144 = vmul.f32 %v143, 0.5
    %v145 = vtanh.pop %v144
    %v146 = vmul.f32 %v145, 0.5
    %v147 = vadd.f32 %v146, 0.5
    %s148 = sld [smem:[#allocation9 + $0x2]]
    %v149 = vstv %s148
    %v150 = vmul.f32 %v149, %v147
    %v151 = vadd.f32 %v125, %v150
    %s152 = sld [smem:[#allocation2]]
    %v153 = vstv %s152
    %v154 = vadd.f32 %v151, %v153
    %v155 = vmul.f32 %v154, 0.5
    %v156 = vtanh.pop %v155
    %v157 = vmul.f32 %v156, 0.5
    %v158 = vadd.f32 %v157, 0.5
    %159 = vst [vmem:[#allocation12] sm:$0xff] %v158
    // Predicated region
    $region38: #{tpu_custom_call.1} parent=1 // pred_check
      _
    $region39: #{tpu_custom_call.1} parent=1 // pred_check_branch
      %161 = sbr.rel (0) target = $region41
    $region40: #{tpu_custom_call.1} parent=1 // pred_region
      %s163 = ssub.s32 128, 128
      %164 = vsyncadd [#allocation5], %s163
      %s166 = sshll.u32 [#allocation12], 4
      %s167 = int_to_ptr.vmem [resolvable:$true] %s166
      %169 = dma.vmem_to_hbm [thread:$0]  %s167, 128, %s5, [#allocation5]
    $region41: #{tpu_custom_call.1} parent=1 // pred_fallthru
      _
    // Predicated region
    $region42: #{tpu_custom_call.1} parent=1 // pred_check
      _
    $region43: #{tpu_custom_call.1} parent=1 // pred_check_branch
      %171 = sbr.rel (0) target = $region45
    $region44: #{tpu_custom_call.1} parent=1 // pred_region
      %172 = dma.done [#allocation5], 128
    $region45: #{tpu_custom_call.1} parent=1 // pred_fallthru
      _
    %173 = vsyncpa [#allocation4], 1
    %174 = vsyncpa [#allocation5], 1
    %175 = vsyncpa [#allocation6], 1
    %176 = vsyncpa [#allocation7], 1
    %177 = vsyncpa [#allocation10], 1

</llo_original>
